<compile_context>
chip_gen: v7x
topology: tpu7x:2x2x1
jax: 0.10.0
libtpu: 0.0.40
codegen_flags: <defaults>
</compile_context>

<pallas_src>
import functools

import jax
import jax.numpy as jnp
from jax import lax
from jax.experimental import pallas as pl
from jax.experimental.pallas import tpu as pltpu

BN_EPS = 1e-5
TILE_R_MAX = 4096                 # stem row tile (bf16 tile ~ tile*64 B, tiny in VMEM)
KL_TILE_ROWS_MAX = 2048
VMEM_LIMIT = 48 * 1024 * 1024     # <= v7x's 64 MiB physical; ample on v5e/v6e (128 MiB)


def _round_up(x, m):
    return (x + m - 1) // m * m


# ---------------------------------------------------------------------------
# Pallas kernels
# ---------------------------------------------------------------------------
def _stem_stats_kernel(patches_ref, w_ref, sum_ref, sumsq_ref):
    """Pass 1: conv tile (bf16 matmul, f32 acc) + per-channel sum / sum-of-squares.

    Grid is (ncores, steps): the leading "parallel" axis gives each TensorCore
    its own (8, c_out) output block (row 0 holds the partial, rest stay zero);
    the "arbitrary" axis streams row tiles with the block resident in VMEM.
    """
    i = pl.program_id(1)

    @pl.when(i == 0)
    def _():
        sum_ref[...] = jnp.zeros_like(sum_ref)
        sumsq_ref[...] = jnp.zeros_like(sumsq_ref)

    conv = jnp.dot(patches_ref[...], w_ref[...],
                   preferred_element_type=jnp.float32)
    sum_ref[0:1, :] += jnp.sum(conv, axis=0, keepdims=True)
    sumsq_ref[0:1, :] += jnp.sum(conv * conv, axis=0, keepdims=True)


def _stem_apply_kernel(patches_ref, w_ref, scale_ref, bias_ref, out_ref):
    """Pass 2: conv tile + folded BatchNorm (y = conv*scale + bias) + tanh -> bf16."""
    conv = jnp.dot(patches_ref[...], w_ref[...],
                   preferred_element_type=jnp.float32)
    y = conv * scale_ref[...] + bias_ref[...]
    out_ref[...] = jnp.tanh(y).astype(out_ref.dtype)


def _kl_div_kernel(inp_ref, tgt_ref, out_ref, acc_ref, *,
                   total_rows, last_block, inv_count):
    """Streaming KLDivLoss ('mean' reduction), 2-core friendly.

    pointwise = where(target > 0, target * (log(target) - input), 0)
    Per step: mask ragged / duplicate rows with iota, sublane-reduce into a
    lane-wide (1, C) VMEM accumulator.  Scalar (×1/count) is written only on
    the last step of each core's sweep into row 0 of its (8, 128) block.
    """
    i = pl.program_id(1)
    steps = pl.num_programs(1)

    @pl.when(i == 0)
    def _():
        acc_ref[...] = jnp.zeros_like(acc_ref)
        out_ref[...] = jnp.zeros_like(out_ref)

    tile_rows = inp_ref.shape[0]
    blk = pl.program_id(0) * steps + i                 # logical block index
    row0 = jnp.minimum(blk, last_block) * tile_rows    # matches the clamped index_map
    row_ids = row0 + lax.broadcasted_iota(jnp.int32, inp_ref.shape, 0)
    valid = jnp.logical_and(row_ids < total_rows, blk <= last_block)

    t = tgt_ref[...].astype(jnp.float32)
    x = inp_ref[...].astype(jnp.float32)
    # TODO(synk): PyTorch propagates NaN for negative targets; masked to 0 here.
    pointwise = jnp.where(jnp.logical_and(valid, t > 0.0),
                          t * (jnp.log(t) - x), 0.0)
    acc_ref[...] += jnp.sum(pointwise, axis=0, keepdims=True)

    @pl.when(i == steps - 1)
    def _():
        out_ref[0:1, 0:1] = jnp.sum(acc_ref[...], keepdims=True) * inv_count


# ---------------------------------------------------------------------------
# Wrappers (im2col, padding/alignment, parameter folding)
# ---------------------------------------------------------------------------
def _im2col(x, k=3, stride=2, pad=1):
    """x: NCHW -> patches [N*Ho*Wo, C*k*k] matching PyTorch (Cin, kh, kw) order."""
    # TODO(synk): patches are materialized in HBM; an in-kernel patch gather with
    # halo'd input tiles would remove this traffic.  Input is bf16 here, halving it.
    n, c, h, w = x.shape
    xp = jnp.pad(x, ((0, 0), (0, 0), (pad, pad), (pad, pad)))
    ho = (h + 2 * pad - k) // stride + 1
    wo = (w + 2 * pad - k) // stride + 1
    cols = []
    for i in range(k):
        for j in range(k):
            cols.append(xp[:, :, i:i + stride * ho:stride, j:j + stride * wo:stride])
    patches = jnp.stack(cols, axis=0).reshape(k, k, n, c, ho, wo)
    patches = patches.transpose(2, 4, 5, 3, 0, 1)        # (N, Ho, Wo, C, kh, kw)
    return patches.reshape(n * ho * wo, c * k * k), ho, wo


@jax.jit
def stem_forward(x, conv_w, gamma, beta):
    """Stem.forward: Conv2d(k=3,s=2,p=1,bias=False) + BatchNorm2d(train) + Tanh.

    Returns the activation in NHWC bf16 (lane-dense minor dim = c_out); the
    NCHW transpose happens only once, at the network boundary.
    """
    n, c_in, h, w = x.shape
    c_out = conv_w.shape[0]
    k_dim = c_in * 9

    x_bf = x.astype(jnp.bfloat16)          # bf16 *before* im2col -> bf16 patches
    patches, ho, wo = _im2col(x_bf)        # (rows, Cin*9) bf16
    rows = n * ho * wo

    k_pad = _round_up(k_dim, 8)            # 27 -> 32 aligned contraction dim
    tile_r = min(TILE_R_MAX, _round_up(rows, 8))
    n_tiles = pl.cdiv(rows, tile_r)
    ncores = 2 if n_tiles >= 2 else 1      # v7x: use both TCs for the stats pass
    n_tiles = _round_up(n_tiles, ncores)
    steps = n_tiles // ncores
    r_pad = n_tiles * tile_r               # zero rows contribute 0 to sums/sumsqs

    patches_p = jnp.pad(patches, ((0, r_pad - rows), (0, k_pad - k_dim)))
    w_mat = conv_w.reshape(c_out, k_dim).T                     # (Cin*9, Cout)
    w_p = jnp.pad(w_mat, ((0, k_pad - k_dim), (0, 0))).astype(jnp.bfloat16)

    mm_flops = 2 * r_pad * k_pad * c_out
    patches_bytes = r_pad * k_pad * 2
    w_bytes = k_pad * c_out * 2

    # ---- pass 1: per-channel sum / sum-of-squares over all rows -------------
    sums_p, sumsq_p = pl.pallas_call(
        _stem_stats_kernel,
        out_shape=(jax.ShapeDtypeStruct((ncores * 8, c_out), jnp.float32),
                   jax.ShapeDtypeStruct((ncores * 8, c_out), jnp.float32)),
        grid=(ncores, steps),
        in_specs=[pl.BlockSpec((tile_r, k_pad), lambda c, i: (c * steps + i, 0)),
                  pl.BlockSpec((k_pad, c_out), lambda c, i: (0, 0))],
        out_specs=(pl.BlockSpec((8, c_out), lambda c, i: (c, 0)),
                   pl.BlockSpec((8, c_out), lambda c, i: (c, 0))),
        compiler_params=pltpu.CompilerParams(
            dimension_semantics=("parallel", "arbitrary"),
            vmem_limit_bytes=VMEM_LIMIT),
        cost_estimate=pl.CostEstimate(
            flops=mm_flops + 3 * r_pad * c_out,
            transcendentals=0,
            bytes_accessed=patches_bytes + w_bytes + 2 * ncores * 8 * c_out * 4),
    )(patches_p, w_p)

    sums = jnp.sum(sums_p, axis=0)         # (c_out,) -- non-row-0 entries are zero
    sumsqs = jnp.sum(sumsq_p, axis=0)

    # Fold BatchNorm (training-mode biased batch stats) into scale / bias.
    # TODO(synk): E[x^2]-E[x]^2 can cancel for large-mean real-image data;
    # a shifted two-pass variance would be safer there.
    inv_r = 1.0 / rows
    mean = sums * inv_r
    var = jnp.maximum(sumsqs * inv_r - mean * mean, 0.0)
    scale = gamma.astype(jnp.float32) * lax.rsqrt(var + BN_EPS)
    bias = beta.astype(jnp.float32) - mean * scale
    scale2 = scale.reshape(1, c_out)
    bias2 = bias.reshape(1, c_out)

    # ---- pass 2: conv + folded BN + tanh, bf16 output, no channel padding ----
    out_flat = pl.pallas_call(
        _stem_apply_kernel,
        out_shape=jax.ShapeDtypeStruct((r_pad, c_out), jnp.bfloat16),
        grid=(r_pad // tile_r,),
        in_specs=[pl.BlockSpec((tile_r, k_pad), lambda i: (i, 0)),
                  pl.BlockSpec((k_pad, c_out), lambda i: (0, 0)),
                  pl.BlockSpec((1, c_out), lambda i: (0, 0)),
                  pl.BlockSpec((1, c_out), lambda i: (0, 0))],
        out_specs=pl.BlockSpec((tile_r, c_out), lambda i: (i, 0)),
        compiler_params=pltpu.CompilerParams(
            dimension_semantics=("parallel",),     # megacore shards row tiles
            vmem_limit_bytes=VMEM_LIMIT),
        cost_estimate=pl.CostEstimate(
            flops=mm_flops + 2 * r_pad * c_out,
            transcendentals=r_pad * c_out,
            bytes_accessed=patches_bytes + w_bytes + r_pad * c_out * 2),
    )(patches_p, w_p, scale2, bias2)

    out = out_flat if r_pad == rows else out_flat[:rows]
    return out.reshape(n, ho, wo, c_out)            # NHWC, bf16


@jax.jit
def kl_div_loss(inp, target):
    """nn.KLDivLoss()(inp, target) with default 'mean' reduction (mean over all elems)."""
    total = int(inp.size)
    if inp.ndim == 0:
        inp2 = inp.reshape(1, 1)
        tgt2 = target.reshape(1, 1)
    elif inp.ndim == 1:
        inp2 = inp.reshape(1, -1)
        tgt2 = target.reshape(1, -1)
    else:
        last = inp.shape[-1]
        inp2 = inp.reshape(-1, last)                 # metadata-only reshape
        tgt2 = target.reshape(-1, last)
    R, C = inp2.shape

    if R <= 8:
        tile_rows = R                                 # block == full dim
    else:
        cap_by_bytes = max(8, (262144 // max(C, 1)) // 8 * 8)
        tile_rows = max(8, min(cap_by_bytes, (R // 8) * 8, KL_TILE_ROWS_MAX))
    n_tiles = pl.cdiv(R, tile_rows)
    ncores = 2 if n_tiles >= 2 else 1                 # v7x: shard across both TCs
    steps = pl.cdiv(n_tiles, ncores)
    last_block = n_tiles - 1                          # clamp target for extra steps

    out = pl.pallas_call(
        functools.partial(_kl_div_kernel, total_rows=R, last_block=last_block,
                          inv_count=1.0 / total),
        out_shape=jax.ShapeDtypeStruct((ncores * 8, 128), jnp.float32),
        grid=(ncores, steps),
        in_specs=[
            pl.BlockSpec((tile_rows, C),
                         lambda c, i: (jnp.minimum(c * steps + i, last_block), 0)),
            pl.BlockSpec((tile_rows, C),
                         lambda c, i: (jnp.minimum(c * steps + i, last_block), 0)),
        ],
        out_specs=pl.BlockSpec((8, 128), lambda c, i: (c, 0)),
        scratch_shapes=[pltpu.VMEM((1, C), jnp.float32)],
        compiler_params=pltpu.CompilerParams(
            dimension_semantics=("parallel", "arbitrary"),
            vmem_limit_bytes=VMEM_LIMIT),
        cost_estimate=pl.CostEstimate(
            flops=5 * R * C,
            transcendentals=R * C,
            bytes_accessed=2 * R * C * 4 + ncores * 8 * 128 * 4),
    )(inp2, tgt2)
    return jnp.sum(out)            # sum of per-core partials (other entries are 0)


def network_kd_forward(x, params, cells_sequence="nn"):
    """Network_kd.forward semantics (cells / last_layer left as identity, see TODO)."""
    s_nhwc = stem_forward(x, params["stem_w"], params["stem_gamma"], params["stem_beta"])
    t_s0 = t_s1 = t_skip = s0 = s1 = skip = s_nhwc
    kd_loss = []
    for _cell_type in cells_sequence:
        # TODO(synk): NetConstructor-built cell bodies are unavailable; identity stand-in.
        s0, (s1, skip) = s1, (s1, skip)
        # NOTE: the reference source seeds the teacher's t_s0 from the *student* s1.
        t_s0, (t_s1, t_skip) = s1, (t_s1, t_skip)
        # TODO(synk): once real cells exist, fuse the KL pointwise+sum into the
        # kernel producing s1/t_s1 to avoid re-reading both activations from HBM.
        kd_loss.append(kl_div_loss(t_s1, s1))
    # TODO(synk): LastLayer is undefined in the reference source; passthrough here.
    x_out = jnp.transpose(s1, (0, 3, 1, 2))     # NCHW at the network boundary only
    t_x = jnp.transpose(t_s1, (0, 3, 1, 2))
    return x_out, t_x, kd_loss


# ---------------------------------------------------------------------------
# Plain-JAX references for numerical sanity checks
# ---------------------------------------------------------------------------
def stem_reference(x, conv_w, gamma, beta):
    conv = lax.conv_general_dilated(
        x, conv_w, window_strides=(2, 2), padding=((1, 1), (1, 1)),
        dimension_numbers=("NCHW", "OIHW", "NCHW"))
    mean = jnp.mean(conv, axis=(0, 2, 3), keepdims=True)
    var = jnp.mean((conv - mean) ** 2, axis=(0, 2, 3), keepdims=True)
    xhat = (conv - mean) * lax.rsqrt(var + BN_EPS)
    y = xhat * gamma.reshape(1, -1, 1, 1) + beta.reshape(1, -1, 1, 1)
    return jnp.tanh(y)


def kl_reference(inp, target):
    return jnp.mean(jnp.where(target > 0,
                              target * (jnp.log(target) - inp), 0.0))


if __name__ == "__main__":
    key = jax.random.PRNGKey(0)
    k_x, k_w, k_a, k_b, k_x2, k_a2, k_b2 = jax.random.split(key, 7)

    N, C_IN, H, W = 2, 3, 16, 16            # Stem expects 3 input channels
    STEM_CHANNELS = 32                       # args.stem_channels (small synthetic value)

    x = jax.random.normal(k_x, (N, C_IN, H, W), dtype=jnp.float32)
    params = {
        "stem_w": jax.random.normal(k_w, (STEM_CHANNELS, C_IN, 3, 3), jnp.float32) * 0.1,
        "stem_gamma": jnp.ones((STEM_CHANNELS,), jnp.float32),   # BatchNorm2d default init
        "stem_beta": jnp.zeros((STEM_CHANNELS,), jnp.float32),
    }

    x_out, t_x, kd_losses = network_kd_forward(x, params, cells_sequence="nn")
    jax.block_until_ready(x_out)
    jax.block_until_ready(t_x)
    for l in kd_losses:
        jax.block_until_ready(l)
    assert x_out.shape == (N, STEM_CHANNELS, H // 2, W // 2)

    # ---- Stem check, small input (single-core grid path) --------------------
    out_nhwc = stem_forward(x, params["stem_w"], params["stem_gamma"], params["stem_beta"])
    ref = stem_reference(x, params["stem_w"], params["stem_gamma"], params["stem_beta"])
    ref_nhwc = jnp.transpose(ref, (0, 2, 3, 1))
    assert out_nhwc.shape == (N, H // 2, W // 2, STEM_CHANNELS)
    assert jnp.allclose(out_nhwc.astype(jnp.float32), ref_nhwc,
                        atol=3e-2, rtol=3e-2), "stem kernel mismatch (small)"

    # ---- Stem check, larger input (2-core stats grid + row padding + slice) -
    x2 = jax.random.normal(k_x2, (2, 3, 160, 160), jnp.float32)
    out2 = stem_forward(x2, params["stem_w"], params["stem_gamma"], params["stem_beta"])
    ref2 = jnp.transpose(
        stem_reference(x2, params["stem_w"], params["stem_gamma"], params["stem_beta"]),
        (0, 2, 3, 1))
    assert out2.shape == (2, 80, 80, STEM_CHANNELS)
    assert jnp.allclose(out2.astype(jnp.float32), ref2,
                        atol=3e-2, rtol=3e-2), "stem kernel mismatch (large)"

    # ---- KL-div check, small ------------------------------------------------
    a = jax.random.normal(k_a, (N, STEM_CHANNELS, 8, 8), jnp.float32)
    b = jax.nn.softmax(jax.random.normal(k_b, (N, STEM_CHANNELS, 8, 8)), axis=1)
    kl = kl_div_loss(a, b)
    assert jnp.allclose(kl, kl_reference(a, b), atol=1e-5, rtol=1e-4), "kl mismatch (small)"

    # ---- KL-div check, larger (2-core grid, clamped duplicate block, ragged tail)
    a2 = jax.random.normal(k_a2, (5000, 96), jnp.float32)
    b2 = jax.nn.softmax(jax.random.normal(k_b2, (5000, 96)), axis=-1)
    kl2 = kl_div_loss(a2, b2)
    assert jnp.allclose(kl2, kl_reference(a2, b2), atol=1e-5, rtol=1e-4), "kl mismatch (large)"

    for l in kd_losses:
        assert jnp.isfinite(l), "kd loss not finite"

    print("KERNEL_OK")
</pallas_src>

<mosaic_0001>
module attributes {stable_mosaic.version = 11 : i64} {
  func.func @_stem_stats_kernel(%arg0: i32, %arg1: i32, %arg2: memref<128x32xbf16, #tpu.memory_space<vmem>>, %arg3: memref<32x32xbf16, #tpu.memory_space<vmem>>, %arg4: memref<8x32xf32, #tpu.memory_space<vmem>>, %arg5: memref<8x32xf32, #tpu.memory_space<vmem>>) attributes {dimension_semantics = [#tpu.dimension_semantics<parallel>, #tpu.dimension_semantics<arbitrary>], iteration_bounds = array<i64: 1, 1>, scalar_prefetch = 0 : i64, scratch_operands = 0 : i64, tpu.core_type = #tpu.core_type<tc>, window_params = [{transform_indices = @transform_0, window_bounds = array<i64: 128, 32>}, {pipeline_mode = #tpu.pipeline_mode<synchronous>, transform_indices = @transform_1, window_bounds = array<i64: 32, 32>}, {transform_indices = @transform_2, window_bounds = array<i64: 8, 32>}, {transform_indices = @transform_3, window_bounds = array<i64: 8, 32>}]} {
    %c0_i32 = arith.constant 0 : i32
    %0 = arith.cmpi eq, %arg1, %c0_i32 : i32
    %1 = arith.extui %0 : i1 to i32
    %c0_i32_0 = arith.constant 0 : i32
    %2 = arith.cmpi ne, %1, %c0_i32_0 : i32
    scf.if %2 {
      %cst_14 = arith.constant 0.000000e+00 : f32
      %17 = vector.broadcast %cst_14 : f32 to vector<8x32xf32>
      %c0_15 = arith.constant 0 : index
      %c0_16 = arith.constant 0 : index
      %18 = vector.load %arg4[%c0_15, %c0_16] : memref<8x32xf32, #tpu.memory_space<vmem>>, vector<8x32xf32>
      tpu.vector_store %arg4[%c0_15, %c0_16], %17 {strides = array<i32>} : memref<8x32xf32, #tpu.memory_space<vmem>>, vector<8x32xf32>,
      %cst_17 = arith.constant 0.000000e+00 : f32
      %19 = vector.broadcast %cst_17 : f32 to vector<8x32xf32>
      %c0_18 = arith.constant 0 : index
      %c0_19 = arith.constant 0 : index
      %20 = vector.load %arg5[%c0_18, %c0_19] : memref<8x32xf32, #tpu.memory_space<vmem>>, vector<8x32xf32>
      tpu.vector_store %arg5[%c0_18, %c0_19], %19 {strides = array<i32>} : memref<8x32xf32, #tpu.memory_space<vmem>>, vector<8x32xf32>,
    } else {
    }
    %c0 = arith.constant 0 : index
    %c0_1 = arith.constant 0 : index
    %3 = vector.load %arg2[%c0, %c0_1] : memref<128x32xbf16, #tpu.memory_space<vmem>>, vector<128x32xbf16>
    %c0_2 = arith.constant 0 : index
    %c0_3 = arith.constant 0 : index
    %4 = vector.load %arg3[%c0_2, %c0_3] : memref<32x32xbf16, #tpu.memory_space<vmem>>, vector<32x32xbf16>
    %cst = arith.constant dense<0.000000e+00> : vector<128x32xf32>
    %5 = tpu.matmul %3, %4, %cst {dimension_numbers = #tpu.dot_dimension_numbers<[1], [0], [0], [1], [0, 0, 1, 1], [], []>} : vector<128x32xbf16>, vector<32x32xbf16>, vector<128x32xf32> -> vector<128x32xf32>
    %c0_4 = arith.constant 0 : index
    %c0_5 = arith.constant 0 : index
    %6 = vector.load %arg4[%c0_4, %c0_5] : memref<8x32xf32, #tpu.memory_space<vmem>>, vector<1x32xf32>
    %cst_6 = arith.constant dense<0.000000e+00> : vector<32xf32>
    %7 = vector.multi_reduction <add>, %5, %cst_6 [0] : vector<128x32xf32> to vector<32xf32>
    %8 = vector.shape_cast %7 : vector<32xf32> to vector<1x32xf32>
    %9 = arith.addf %6, %8 : vector<1x32xf32>
    %c0_7 = arith.constant 0 : index
    %c0_8 = arith.constant 0 : index
    %10 = vector.load %arg4[%c0_7, %c0_8] : memref<8x32xf32, #tpu.memory_space<vmem>>, vector<1x32xf32>
    tpu.vector_store %arg4[%c0_7, %c0_8], %9 {strides = array<i32>} : memref<8x32xf32, #tpu.memory_space<vmem>>, vector<1x32xf32>,
    %c0_9 = arith.constant 0 : index
    %c0_10 = arith.constant 0 : index
    %11 = vector.load %arg5[%c0_9, %c0_10] : memref<8x32xf32, #tpu.memory_space<vmem>>, vector<1x32xf32>
    %12 = arith.mulf %5, %5 : vector<128x32xf32>
    %cst_11 = arith.constant dense<0.000000e+00> : vector<32xf32>
    %13 = vector.multi_reduction <add>, %12, %cst_11 [0] : vector<128x32xf32> to vector<32xf32>
    %14 = vector.shape_cast %13 : vector<32xf32> to vector<1x32xf32>
    %15 = arith.addf %11, %14 : vector<1x32xf32>
    %c0_12 = arith.constant 0 : index
    %c0_13 = arith.constant 0 : index
    %16 = vector.load %arg5[%c0_12, %c0_13] : memref<8x32xf32, #tpu.memory_space<vmem>>, vector<1x32xf32>
    tpu.vector_store %arg5[%c0_12, %c0_13], %15 {strides = array<i32>} : memref<8x32xf32, #tpu.memory_space<vmem>>, vector<1x32xf32>,
    return
  }
  func.func @transform_0(%arg0: i32, %arg1: i32) -> (i32, i32) {
    %c1_i32 = arith.constant 1 : i32
    %0 = arith.muli %arg0, %c1_i32 : i32
    %1 = arith.addi %0, %arg1 : i32
    %c0_i32 = arith.constant 0 : i32
    %c0_i32_0 = arith.constant 0 : i32
    return %1, %c0_i32 : i32, i32
  }
  func.func @transform_1(%arg0: i32, %arg1: i32) -> (i32, i32) {
    %c0_i32 = arith.constant 0 : i32
    %c0_i32_0 = arith.constant 0 : i32
    %c0_i32_1 = arith.constant 0 : i32
    return %c0_i32, %c0_i32_0 : i32, i32
  }
  func.func @transform_2(%arg0: i32, %arg1: i32) -> (i32, i32) {
    %c0_i32 = arith.constant 0 : i32
    %c0_i32_0 = arith.constant 0 : i32
    return %arg0, %c0_i32 : i32, i32
  }
  func.func @transform_3(%arg0: i32, %arg1: i32) -> (i32, i32) {
    %c0_i32 = arith.constant 0 : i32
    %c0_i32_0 = arith.constant 0 : i32
    return %arg0, %c0_i32 : i32, i32
  }
}

module attributes {stable_mosaic.version = 11 : i64} {
  func.func @_stem_apply_kernel(%arg0: i32, %arg1: memref<128x32xbf16, #tpu.memory_space<vmem>>, %arg2: memref<32x32xbf16, #tpu.memory_space<vmem>>, %arg3: memref<1x32xf32, #tpu.memory_space<vmem>>, %arg4: memref<1x32xf32, #tpu.memory_space<vmem>>, %arg5: memref<128x32xbf16, #tpu.memory_space<vmem>>) attributes {dimension_semantics = [#tpu.dimension_semantics<parallel>], iteration_bounds = array<i64: 1>, scalar_prefetch = 0 : i64, scratch_operands = 0 : i64, tpu.core_type = #tpu.core_type<tc>, window_params = [{transform_indices = @transform_0, window_bounds = array<i64: 128, 32>}, {pipeline_mode = #tpu.pipeline_mode<synchronous>, transform_indices = @transform_1, window_bounds = array<i64: 32, 32>}, {pipeline_mode = #tpu.pipeline_mode<synchronous>, transform_indices = @transform_2, window_bounds = array<i64: 1, 32>}, {pipeline_mode = #tpu.pipeline_mode<synchronous>, transform_indices = @transform_3, window_bounds = array<i64: 1, 32>}, {transform_indices = @transform_4, window_bounds = array<i64: 128, 32>}]} {
    %c0 = arith.constant 0 : index
    %c0_0 = arith.constant 0 : index
    %0 = vector.load %arg1[%c0, %c0_0] : memref<128x32xbf16, #tpu.memory_space<vmem>>, vector<128x32xbf16>
    %c0_1 = arith.constant 0 : index
    %c0_2 = arith.constant 0 : index
    %1 = vector.load %arg2[%c0_1, %c0_2] : memref<32x32xbf16, #tpu.memory_space<vmem>>, vector<32x32xbf16>
    %cst = arith.constant dense<0.000000e+00> : vector<128x32xf32>
    %2 = tpu.matmul %0, %1, %cst {dimension_numbers = #tpu.dot_dimension_numbers<[1], [0], [0], [1], [0, 0, 1, 1], [], []>} : vector<128x32xbf16>, vector<32x32xbf16>, vector<128x32xf32> -> vector<128x32xf32>
    %c0_3 = arith.constant 0 : index
    %c0_4 = arith.constant 0 : index
    %3 = vector.load %arg3[%c0_3, %c0_4] : memref<1x32xf32, #tpu.memory_space<vmem>>, vector<1x32xf32>
    %4 = vector.broadcast %3 : vector<1x32xf32> to vector<128x32xf32>
    %5 = arith.mulf %2, %4 : vector<128x32xf32>
    %c0_5 = arith.constant 0 : index
    %c0_6 = arith.constant 0 : index
    %6 = vector.load %arg4[%c0_5, %c0_6] : memref<1x32xf32, #tpu.memory_space<vmem>>, vector<1x32xf32>
    %7 = vector.broadcast %6 : vector<1x32xf32> to vector<128x32xf32>
    %8 = arith.addf %5, %7 : vector<128x32xf32>
    %9 = math.tanh %8 : vector<128x32xf32>
    %10 = arith.truncf %9 : vector<128x32xf32> to vector<128x32xbf16>
    %c0_7 = arith.constant 0 : index
    %c0_8 = arith.constant 0 : index
    %11 = vector.load %arg5[%c0_7, %c0_8] : memref<128x32xbf16, #tpu.memory_space<vmem>>, vector<128x32xbf16>
    tpu.vector_store %arg5[%c0_7, %c0_8], %10 {strides = array<i32>} : memref<128x32xbf16, #tpu.memory_space<vmem>>, vector<128x32xbf16>,
    return
  }
  func.func @transform_0(%arg0: i32) -> (i32, i32) {
    %c0_i32 = arith.constant 0 : i32
    %c0_i32_0 = arith.constant 0 : i32
    return %arg0, %c0_i32 : i32, i32
  }
  func.func @transform_1(%arg0: i32) -> (i32, i32) {
    %c0_i32 = arith.constant 0 : i32
    %c0_i32_0 = arith.constant 0 : i32
    %c0_i32_1 = arith.constant 0 : i32
    return %c0_i32, %c0_i32_0 : i32, i32
  }
  func.func @transform_2(%arg0: i32) -> (i32, i32) {
    %c0_i32 = arith.constant 0 : i32
    %c0_i32_0 = arith.constant 0 : i32
    %c0_i32_1 = arith.constant 0 : i32
    return %c0_i32, %c0_i32_0 : i32, i32
  }
  func.func @transform_3(%arg0: i32) -> (i32, i32) {
    %c0_i32 = arith.constant 0 : i32
    %c0_i32_0 = arith.constant 0 : i32
    %c0_i32_1 = arith.constant 0 : i32
    return %c0_i32, %c0_i32_0 : i32, i32
  }
  func.func @transform_4(%arg0: i32) -> (i32, i32) {
    %c0_i32 = arith.constant 0 : i32
    %c0_i32_0 = arith.constant 0 : i32
    return %arg0, %c0_i32 : i32, i32
  }
}

</mosaic_0001>

<llo_original>
// kernel: stem_forward.2
$region0: #{stem_forward.2}
  #allocation0 [shape = 'u32[]', space=smem, size = 0x4, offset = 0x4, fixed_abs, tag = 'smem constant byte address 0x4 - core index']
  #allocation1 [shape = 'u32[144,128]{1,0:T(1,128)}', space=vmem, size = 0x12000, scoped, tag = 'internal scratch']
  %s0 = inlined_call_operand.vmem [shape: bf16[128,32], index: 0, kind: input, shape index: {}]
  %s1 = inlined_call_operand.vmem [shape: bf16[32,32], index: 1, kind: input, shape index: {}]
  %s2 = inlined_call_operand.vmem [shape: f32[8,32], index: 2, kind: output, shape index: {0}]
  %s3 = inlined_call_operand.vmem [shape: f32[8,32], index: 3, kind: output, shape index: {1}]
  %4 = xla_tuple %s2, %s3
  %s5 = sld [smem:[#allocation0]]
  $region30: #{stem_forward.2} parent=0
    _
  %s7 = ssub.s32 1, %s5
  %s8 = scalar_select 0, %s7, %s5
  // Predicated region
  $region2: #{stem_forward.2} parent=0 // pred_check
    _
  $region3: #{stem_forward.2} parent=0 // pred_check_branch
    %10 = sbr.rel (0) target = $region5
  $region4: #{stem_forward.2} parent=0 // pred_region
    %s11 = sadd.s32 0, 0
    %s12 = smul.u32 16, %s11
    %p13 = scmp.lt.s32.totalorder %s12, 15
    %s14 = scalar_select %p13, %s12, 15
    %s15 = smul.addr %s14, 4
    %s16 = scalar_lea.vmem %s0, %s15
    %s17 = sadd.s32 0, 0
    %s18 = smul.u32 16, %s17
  $region5: #{stem_forward.2} parent=0 // pred_fallthru
    _
  // Predicated region
  $region6: #{stem_forward.2} parent=0 // pred_check
    _
  $region7: #{stem_forward.2} parent=0 // pred_check_branch
    %20 = sbr.rel (0) target = $region9
  $region8: #{stem_forward.2} parent=0 // pred_region
    _
  $region9: #{stem_forward.2} parent=0 // pred_fallthru
    _
  %s21 = sadd.s32 0, 0
  %s22 = smul.u32 16, %s21
  %p23 = scmp.lt.s32.totalorder %s22, 15
  %s24 = scalar_select %p23, %s22, 15
  %s25 = smul.addr %s24, 4
  %s26 = scalar_lea.vmem %s0, %s25
  %s27 = sadd.s32 0, 0
  %s28 = smul.u32 16, %s27
  %p29 = scmp.lt.s32.totalorder %s28, 15
  %s30 = scalar_select %p29, %s28, 15
  %s31 = smul.addr %s30, 4
  %s32 = scalar_lea.vmem %s0, %s31
  %s33 = sadd.s32 0, 0
  %s34 = smul.u32 16, %s33
  %p36 = scmp.eq.s32.totalorder 0, 0
  // Predicated region
  $region10: #{stem_forward.2} parent=0 // pred_check
    %p37 = pneg %p36
  $region11: #{stem_forward.2} parent=0 // pred_check_branch
    %39 = sbr.rel (%p37) target = $region13
  $region12: #{stem_forward.2} parent=0 // pred_region
    %vm40 = vcmask 261120
    %41 = vst.msk [vmem:[%s2] sm:$0xff] %vm40, 0.0
    %42 = vst.msk [vmem:[%s3] sm:$0xff] %vm40, 0.0
  $region13: #{stem_forward.2} parent=0 // pred_fallthru
    _
  %v43 = vld [vmem:[%s32] sm:$0xf]
  %v44 = vld [vmem:[%s32 + $0x4] sm:$0xf]
  %v45 = vld [vmem:[%s32 + $0x8] sm:$0xf]
  %v46 = vld [vmem:[%s32 + $0xc] sm:$0xf]
  %v47 = vld [vmem:[%s32 + $0x10] sm:$0xf]
  %v48 = vld [vmem:[%s32 + $0x14] sm:$0xf]
  %v49 = vld [vmem:[%s32 + $0x18] sm:$0xf]
  %v50 = vld [vmem:[%s32 + $0x1c] sm:$0xf]
  %v51 = vld [vmem:[%s32 + $0x20] sm:$0xf]
  %v52 = vld [vmem:[%s32 + $0x24] sm:$0xf]
  %v53 = vld [vmem:[%s32 + $0x28] sm:$0xf]
  %v54 = vld [vmem:[%s32 + $0x2c] sm:$0xf]
  %v55 = vld [vmem:[%s32 + $0x30] sm:$0xf]
  %v56 = vld [vmem:[%s32 + $0x34] sm:$0xf]
  %v57 = vld [vmem:[%s32 + $0x38] sm:$0xf]
  %v58 = vld [vmem:[%s32 + $0x3c] sm:$0xf]
  %v59 = vld [vmem:[%s1] sm:$0xf]
  %v60 = vld [vmem:[%s1 + $0x4] sm:$0xf]
  %v61 = vld [vmem:[%s1 + $0x8] sm:$0xf]
  %v62 = vld [vmem:[%s1 + $0xc] sm:$0xf]
  %v79 = vunpack.c.l.b16 %v43
  %v80 = vunpack.c.l.b16 %v44
  %v81 = vunpack.c.l.b16 %v45
  %v82 = vunpack.c.l.b16 %v46
  %v83 = vunpack.c.l.b16 %v47
  %v84 = vunpack.c.l.b16 %v48
  %v85 = vunpack.c.l.b16 %v49
  %v86 = vunpack.c.l.b16 %v50
  %v87 = vunpack.c.l.b16 %v51
  %v88 = vunpack.c.l.b16 %v52
  %v89 = vunpack.c.l.b16 %v53
  %v90 = vunpack.c.l.b16 %v54
  %v91 = vunpack.c.l.b16 %v55
  %v92 = vunpack.c.l.b16 %v56
  %v93 = vunpack.c.l.b16 %v57
  %v94 = vunpack.c.l.b16 %v58
  %v95 = vpack.c.b16 %v80, %v79
  %v96 = vpack.c.b16 %v82, %v81
  %v97 = vpack.c.b16 %v84, %v83
  %v98 = vpack.c.b16 %v86, %v85
  %v99 = vpack.c.b16 %v88, %v87
  %v100 = vpack.c.b16 %v90, %v89
  %v101 = vpack.c.b16 %v92, %v91
  %v102 = vpack.c.b16 %v94, %v93
  %v107 = vunpack.c.l.b16 %v59
  %v108 = vunpack.c.l.b16 %v60
  %v109 = vunpack.c.l.b16 %v61
  %v110 = vunpack.c.l.b16 %v62
  %v111 = vpack.c.b16 %v108, %v107
  %v112 = vpack.c.b16 %v110, %v109
  %vm115 = vcmask 261120
  %v117 = vsel %vm115, %v95, 0
  %v120 = vsel %vm115, %v96, 0
  %v123 = vsel %vm115, %v97, 0
  %v126 = vsel %vm115, %v98, 0
  %v129 = vsel %vm115, %v99, 0
  %v132 = vsel %vm115, %v100, 0
  %v135 = vsel %vm115, %v101, 0
  %v138 = vsel %vm115, %v102, 0
  %140 = vmatprep.subr.bf16.mxu0 0
  %141 = vmatpush1.bf16.msra.mxu0 %v111
  %142 = vmatprep.subr.bf16.mxu0 0
  %143 = vmatpush1.bf16.msra.mxu0 %v112
  %144 = vmatprep.subr.bf16.mxu0 0
  %145 = vmatpush1.bf16.msra.mxu0 0
  %146 = vmatprep.subr.bf16.mxu0 0
  %147 = vmatpush1.bf16.msra.mxu0 0
  %148 = vmatprep.subr.bf16.mxu0 0
  %149 = vmatpush1.bf16.msra.mxu0 0
  %150 = vmatprep.subr.bf16.mxu0 0
  %151 = vmatpush1.bf16.msra.mxu0 0
  %152 = vmatprep.subr.bf16.mxu0 0
  %153 = vmatpush1.bf16.msra.mxu0 0
  %154 = vmatprep.subr.bf16.mxu0 0
  %155 = vmatpush1.bf16.msra.mxu0 0
  %156 = vmatprep.subr.bf16.mxu0 0
  %157 = vmatpush1.bf16.msra.mxu0 0
  %158 = vmatprep.subr.bf16.mxu0 0
  %159 = vmatpush1.bf16.msra.mxu0 0
  %160 = vmatprep.subr.bf16.mxu0 0
  %161 = vmatpush1.bf16.msra.mxu0 0
  %162 = vmatprep.subr.bf16.mxu0 0
  %163 = vmatpush1.bf16.msra.mxu0 0
  %164 = vmatprep.subr.bf16.mxu0 0
  %165 = vmatpush1.bf16.msra.mxu0 0
  %166 = vmatprep.subr.bf16.mxu0 0
  %167 = vmatpush1.bf16.msra.mxu0 0
  %168 = vmatprep.subr.bf16.mxu0 0
  %169 = vmatpush1.bf16.msra.mxu0 0
  %170 = vmatprep.subr.bf16.mxu0 0
  %171 = vmatpush1.bf16.msra.mxu0 0
  %172 = vmatprep.mubr.bf16.mxu0 0
  %173 = vmatmul.mubr.bf16.gmra.mrb[0].mxu0 %v117
  %v174 = vpop.f32.mrb[0].mxu0
  %v175 = vadd.f32 0.0, %v174
  %v176 = vpop.f32.mrb[0].mxu0
  %v177 = vpop.f32.mrb[0].mxu0
  %v178 = vadd.f32 0.0, %v177
  %v179 = vpop.f32.mrb[0].mxu0
  %180 = vmatprep.mubr.bf16.mxu0 0
  %181 = vmatmul.mubr.bf16.gmra.mrb[0].mxu0 %v120
  %v182 = vpop.f32.mrb[0].mxu0
  %v183 = vadd.f32 0.0, %v182
  %v184 = vpop.f32.mrb[0].mxu0
  %v185 = vpop.f32.mrb[0].mxu0
  %v186 = vadd.f32 0.0, %v185
  %v187 = vpop.f32.mrb[0].mxu0
  %188 = vmatprep.mubr.bf16.mxu0 0
  %189 = vmatmul.mubr.bf16.gmra.mrb[0].mxu0 %v123
  %v190 = vpop.f32.mrb[0].mxu0
  %v191 = vadd.f32 0.0, %v190
  %v192 = vpop.f32.mrb[0].mxu0
  %v193 = vpop.f32.mrb[0].mxu0
  %v194 = vadd.f32 0.0, %v193
  %v195 = vpop.f32.mrb[0].mxu0
  %196 = vmatprep.mubr.bf16.mxu0 0
  %197 = vmatmul.mubr.bf16.gmra.mrb[0].mxu0 %v126
  %v198 = vpop.f32.mrb[0].mxu0
  %v199 = vadd.f32 0.0, %v198
  %v200 = vpop.f32.mrb[0].mxu0
  %v201 = vpop.f32.mrb[0].mxu0
  %v202 = vadd.f32 0.0, %v201
  %v203 = vpop.f32.mrb[0].mxu0
  %204 = vmatprep.mubr.bf16.mxu0 0
  %205 = vmatmul.mubr.bf16.gmra.mrb[0].mxu0 %v129
  %v206 = vpop.f32.mrb[0].mxu0
  %v207 = vadd.f32 0.0, %v206
  %v208 = vpop.f32.mrb[0].mxu0
  %v209 = vpop.f32.mrb[0].mxu0
  %v210 = vadd.f32 0.0, %v209
  %v211 = vpop.f32.mrb[0].mxu0
  %212 = vmatprep.mubr.bf16.mxu0 0
  %213 = vmatmul.mubr.bf16.gmra.mrb[0].mxu0 %v132
  %v214 = vpop.f32.mrb[0].mxu0
  %v215 = vadd.f32 0.0, %v214
  %v216 = vpop.f32.mrb[0].mxu0
  %v217 = vpop.f32.mrb[0].mxu0
  %v218 = vadd.f32 0.0, %v217
  %v219 = vpop.f32.mrb[0].mxu0
  %220 = vmatprep.mubr.bf16.mxu0 0
  %221 = vmatmul.mubr.bf16.gmra.mrb[0].mxu0 %v135
  %v222 = vpop.f32.mrb[0].mxu0
  %v223 = vadd.f32 0.0, %v222
  %v224 = vpop.f32.mrb[0].mxu0
  %v225 = vpop.f32.mrb[0].mxu0
  %v226 = vadd.f32 0.0, %v225
  %v227 = vpop.f32.mrb[0].mxu0
  %228 = vmatprep.mubr.bf16.mxu0 0
  %229 = vmatmul.mubr.bf16.gmra.mrb[0].mxu0 %v138
  %v230 = vpop.f32.mrb[0].mxu0
  %v231 = vadd.f32 0.0, %v230
  %v232 = vpop.f32.mrb[0].mxu0
  %v233 = vpop.f32.mrb[0].mxu0
  %v234 = vadd.f32 0.0, %v233
  %v235 = vpop.f32.mrb[0].mxu0
  %236 = vdwg.mxu0
  %v237 = vld [vmem:[%s2] sm:$0x1]
  %v238 = vsel %vm115, %v175, 0.0
  %v239 = vsel %vm115, %v178, 0.0
  %v240 = vadd.f32 %v238, %v239
  %v241 = vsel %vm115, %v183, 0.0
  %v242 = vadd.f32 %v240, %v241
  %v243 = vsel %vm115, %v186, 0.0
  %v244 = vadd.f32 %v242, %v243
  %v245 = vsel %vm115, %v191, 0.0
  %v246 = vadd.f32 %v244, %v245
  %v247 = vsel %vm115, %v194, 0.0
  %v248 = vadd.f32 %v246, %v247
  %v249 = vsel %vm115, %v199, 0.0
  %v250 = vadd.f32 %v248, %v249
  %v251 = vsel %vm115, %v202, 0.0
  %v252 = vadd.f32 %v250, %v251
  %v253 = vsel %vm115, %v207, 0.0
  %v254 = vadd.f32 %v252, %v253
  %v255 = vsel %vm115, %v210, 0.0
  %v256 = vadd.f32 %v254, %v255
  %v257 = vsel %vm115, %v215, 0.0
  %v258 = vadd.f32 %v256, %v257
  %v259 = vsel %vm115, %v218, 0.0
  %v260 = vadd.f32 %v258, %v259
  %v261 = vsel %vm115, %v223, 0.0
  %v262 = vadd.f32 %v260, %v261
  %v263 = vsel %vm115, %v226, 0.0
  %v264 = vadd.f32 %v262, %v263
  %v265 = vsel %vm115, %v231, 0.0
  %v266 = vadd.f32 %v264, %v265
  %v267 = vsel %vm115, %v234, 0.0
  %v268 = vadd.f32 %v266, %v267
  %v269 = vrot.slane %v268, 4
  %v270 = vadd.f32 %v268, %v269
  %v271 = vrot.slane %v270, 2
  %v272 = vadd.f32 %v270, %v271
  %v273 = vrot.slane %v272, 1
  %v274 = vadd.f32 %v272, %v273
  %v275 = vadd.f32 %v237, %v274
  %vm276 = vcmask 253952
  %277 = vst.msk [vmem:[%s2] sm:$0x1] %vm276, %v275
  %v278 = vld [vmem:[%s3] sm:$0x1]
  %v279 = vmul.f32 %v175, %v175
  %v280 = vmul.f32 %v178, %v178
  %v281 = vmul.f32 %v183, %v183
  %v282 = vmul.f32 %v186, %v186
  %v283 = vmul.f32 %v191, %v191
  %v284 = vmul.f32 %v194, %v194
  %v285 = vmul.f32 %v199, %v199
  %v286 = vmul.f32 %v202, %v202
  %v287 = vmul.f32 %v207, %v207
  %v288 = vmul.f32 %v210, %v210
  %v289 = vmul.f32 %v215, %v215
  %v290 = vmul.f32 %v218, %v218
  %v291 = vmul.f32 %v223, %v223
  %v292 = vmul.f32 %v226, %v226
  %v293 = vmul.f32 %v231, %v231
  %v294 = vmul.f32 %v234, %v234
  %v295 = vsel %vm115, %v279, 0.0
  %v296 = vsel %vm115, %v280, 0.0
  %v297 = vadd.f32 %v295, %v296
  %v298 = vsel %vm115, %v281, 0.0
  %v299 = vadd.f32 %v297, %v298
  %v300 = vsel %vm115, %v282, 0.0
  %v301 = vadd.f32 %v299, %v300
  %v302 = vsel %vm115, %v283, 0.0
  %v303 = vadd.f32 %v301, %v302
  %v304 = vsel %vm115, %v284, 0.0
  %v305 = vadd.f32 %v303, %v304
  %v306 = vsel %vm115, %v285, 0.0
  %v307 = vadd.f32 %v305, %v306
  %v308 = vsel %vm115, %v286, 0.0
  %v309 = vadd.f32 %v307, %v308
  %v310 = vsel %vm115, %v287, 0.0
  %v311 = vadd.f32 %v309, %v310
  %v312 = vsel %vm115, %v288, 0.0
  %v313 = vadd.f32 %v311, %v312
  %v314 = vsel %vm115, %v289, 0.0
  %v315 = vadd.f32 %v313, %v314
  %v316 = vsel %vm115, %v290, 0.0
  %v317 = vadd.f32 %v315, %v316
  %v318 = vsel %vm115, %v291, 0.0
  %v319 = vadd.f32 %v317, %v318
  %v320 = vsel %vm115, %v292, 0.0
  %v321 = vadd.f32 %v319, %v320
  %v322 = vsel %vm115, %v293, 0.0
  %v323 = vadd.f32 %v321, %v322
  %v324 = vsel %vm115, %v294, 0.0
  %v325 = vadd.f32 %v323, %v324
  %v326 = vrot.slane %v325, 4
  %v327 = vadd.f32 %v325, %v326
  %v328 = vrot.slane %v327, 2
  %v329 = vadd.f32 %v327, %v328
  %v330 = vrot.slane %v329, 1
  %v331 = vadd.f32 %v329, %v330
  %v332 = vadd.f32 %v278, %v331
  %333 = vst.msk [vmem:[%s3] sm:$0x1] %vm276, %v332
  // Predicated region
  $region14: #{stem_forward.2} parent=0 // pred_check
    _
  $region15: #{stem_forward.2} parent=0 // pred_check_branch
    %335 = sbr.rel (0) target = $region17
  $region16: #{stem_forward.2} parent=0 // pred_region
    _
  $region17: #{stem_forward.2} parent=0 // pred_fallthru
    _
  // Predicated region
  $region18: #{stem_forward.2} parent=0 // pred_check
    _
  $region19: #{stem_forward.2} parent=0 // pred_check_branch
    %337 = sbr.rel (0) target = $region21
  $region20: #{stem_forward.2} parent=0 // pred_region
    _
  $region21: #{stem_forward.2} parent=0 // pred_fallthru
    _
  // Predicated region
  $region22: #{stem_forward.2} parent=0 // pred_check
    _
  $region23: #{stem_forward.2} parent=0 // pred_check_branch
    %339 = sbr.rel (0) target = $region25
  $region24: #{stem_forward.2} parent=0 // pred_region
    _
  $region25: #{stem_forward.2} parent=0 // pred_fallthru
    _
  // Predicated region
  $region26: #{stem_forward.2} parent=0 // pred_check
    _
  $region27: #{stem_forward.2} parent=0 // pred_check_branch
    %341 = sbr.rel (0) target = $region29
  $region28: #{stem_forward.2} parent=0 // pred_region
    _
  $region29: #{stem_forward.2} parent=0 // pred_fallthru
    _

// kernel: stem_forward.3
$region0: #{stem_forward.3}
  #allocation0 [shape = 'u32[]', space=smem, size = 0x4, offset = 0x4, fixed_abs, tag = 'smem constant byte address 0x4 - core index']
  #allocation1 [shape = 'u32[144,128]{1,0:T(1,128)}', space=vmem, size = 0x12000, scoped, tag = 'internal scratch']
  %s0 = inlined_call_operand.vmem [shape: bf16[128,32], index: 0, kind: input, shape index: {}]
  %s1 = inlined_call_operand.vmem [shape: bf16[32,32], index: 1, kind: input, shape index: {}]
  %s2 = inlined_call_operand.vmem [shape: f32[1,32], index: 2, kind: input, shape index: {}]
  %s3 = inlined_call_operand.vmem [shape: f32[1,32], index: 3, kind: input, shape index: {}]
  %s4 = inlined_call_operand.hbm [shape: bf16[128,32], index: 4, kind: output, shape index: {}]
  %s5 = sld [smem:[#allocation0]]
  $region26: #{stem_forward.3} parent=0
    _
  %s7 = ssub.s32 1, %s5
  %s8 = scalar_select 0, %s7, %s5
  $region1: #{stem_forward.3} parent=0
    #allocation2 [shape = 'u8[32768]{0}', space=vmem, size = 0x8000, scoped, tag = 'output window, operand 0, single buffered']
    #allocation3 [shape = 's32[1]{0}', space=sflag, size = 0x4, scoped, tag = 'scoped memory for stem_forward.3']
    %9 = vsyncpa [#allocation3], 0
    // Predicated region
    $region2: #{stem_forward.3} parent=1 // pred_check
      _
    $region3: #{stem_forward.3} parent=1 // pred_check_branch
      %11 = sbr.rel (0) target = $region5
    $region4: #{stem_forward.3} parent=1 // pred_region
      _
    $region5: #{stem_forward.3} parent=1 // pred_fallthru
      _
    // Predicated region
    $region6: #{stem_forward.3} parent=1 // pred_check
      _
    $region7: #{stem_forward.3} parent=1 // pred_check_branch
      %13 = sbr.rel (0) target = $region9
    $region8: #{stem_forward.3} parent=1 // pred_region
      _
    $region9: #{stem_forward.3} parent=1 // pred_fallthru
      _
    // Predicated region
    $region10: #{stem_forward.3} parent=1 // pred_check
      _
    $region11: #{stem_forward.3} parent=1 // pred_check_branch
      %15 = sbr.rel (0) target = $region13
    $region12: #{stem_forward.3} parent=1 // pred_region
      _
    $region13: #{stem_forward.3} parent=1 // pred_fallthru
      _
    // Predicated region
    $region14: #{stem_forward.3} parent=1 // pred_check
      _
    $region15: #{stem_forward.3} parent=1 // pred_check_branch
      %17 = sbr.rel (0) target = $region17
    $region16: #{stem_forward.3} parent=1 // pred_region
      _
    $region17: #{stem_forward.3} parent=1 // pred_fallthru
      _
    %v19 = vld [vmem:[%s0] sm:$0xf]
    %v20 = vld [vmem:[%s0 + $0x4] sm:$0xf]
    %v21 = vld [vmem:[%s0 + $0x8] sm:$0xf]
    %v22 = vld [vmem:[%s0 + $0xc] sm:$0xf]
    %v23 = vld [vmem:[%s0 + $0x10] sm:$0xf]
    %v24 = vld [vmem:[%s0 + $0x14] sm:$0xf]
    %v25 = vld [vmem:[%s0 + $0x18] sm:$0xf]
    %v26 = vld [vmem:[%s0 + $0x1c] sm:$0xf]
    %v27 = vld [vmem:[%s0 + $0x20] sm:$0xf]
    %v28 = vld [vmem:[%s0 + $0x24] sm:$0xf]
    %v29 = vld [vmem:[%s0 + $0x28] sm:$0xf]
    %v30 = vld [vmem:[%s0 + $0x2c] sm:$0xf]
    %v31 = vld [vmem:[%s0 + $0x30] sm:$0xf]
    %v32 = vld [vmem:[%s0 + $0x34] sm:$0xf]
    %v33 = vld [vmem:[%s0 + $0x38] sm:$0xf]
    %v34 = vld [vmem:[%s0 + $0x3c] sm:$0xf]
    %v35 = vld [vmem:[%s1] sm:$0xf]
    %v36 = vld [vmem:[%s1 + $0x4] sm:$0xf]
    %v37 = vld [vmem:[%s1 + $0x8] sm:$0xf]
    %v38 = vld [vmem:[%s1 + $0xc] sm:$0xf]
    %v55 = vunpack.c.l.b16 %v19
    %v56 = vunpack.c.l.b16 %v20
    %v57 = vunpack.c.l.b16 %v21
    %v58 = vunpack.c.l.b16 %v22
    %v59 = vunpack.c.l.b16 %v23
    %v60 = vunpack.c.l.b16 %v24
    %v61 = vunpack.c.l.b16 %v25
    %v62 = vunpack.c.l.b16 %v26
    %v63 = vunpack.c.l.b16 %v27
    %v64 = vunpack.c.l.b16 %v28
    %v65 = vunpack.c.l.b16 %v29
    %v66 = vunpack.c.l.b16 %v30
    %v67 = vunpack.c.l.b16 %v31
    %v68 = vunpack.c.l.b16 %v32
    %v69 = vunpack.c.l.b16 %v33
    %v70 = vunpack.c.l.b16 %v34
    %v71 = vpack.c.b16 %v56, %v55
    %v72 = vpack.c.b16 %v58, %v57
    %v73 = vpack.c.b16 %v60, %v59
    %v74 = vpack.c.b16 %v62, %v61
    %v75 = vpack.c.b16 %v64, %v63
    %v76 = vpack.c.b16 %v66, %v65
    %v77 = vpack.c.b16 %v68, %v67
    %v78 = vpack.c.b16 %v70, %v69
    %v83 = vunpack.c.l.b16 %v35
    %v84 = vunpack.c.l.b16 %v36
    %v85 = vunpack.c.l.b16 %v37
    %v86 = vunpack.c.l.b16 %v38
    %v87 = vpack.c.b16 %v84, %v83
    %v88 = vpack.c.b16 %v86, %v85
    %vm91 = vcmask 261120
    %v93 = vsel %vm91, %v71, 0
    %v96 = vsel %vm91, %v72, 0
    %v99 = vsel %vm91, %v73, 0
    %v102 = vsel %vm91, %v74, 0
    %v105 = vsel %vm91, %v75, 0
    %v108 = vsel %vm91, %v76, 0
    %v111 = vsel %vm91, %v77, 0
    %v114 = vsel %vm91, %v78, 0
    %116 = vmatprep.subr.bf16.mxu0 0
    %117 = vmatpush1.bf16.msra.mxu0 %v87
    %118 = vmatprep.subr.bf16.mxu0 0
    %119 = vmatpush1.bf16.msra.mxu0 %v88
    %120 = vmatprep.subr.bf16.mxu0 0
    %121 = vmatpush1.bf16.msra.mxu0 0
    %122 = vmatprep.subr.bf16.mxu0 0
    %123 = vmatpush1.bf16.msra.mxu0 0
    %124 = vmatprep.subr.bf16.mxu0 0
    %125 = vmatpush1.bf16.msra.mxu0 0
    %126 = vmatprep.subr.bf16.mxu0 0
    %127 = vmatpush1.bf16.msra.mxu0 0
    %128 = vmatprep.subr.bf16.mxu0 0
    %129 = vmatpush1.bf16.msra.mxu0 0
    %130 = vmatprep.subr.bf16.mxu0 0
    %131 = vmatpush1.bf16.msra.mxu0 0
    %132 = vmatprep.subr.bf16.mxu0 0
    %133 = vmatpush1.bf16.msra.mxu0 0
    %134 = vmatprep.subr.bf16.mxu0 0
    %135 = vmatpush1.bf16.msra.mxu0 0
    %136 = vmatprep.subr.bf16.mxu0 0
    %137 = vmatpush1.bf16.msra.mxu0 0
    %138 = vmatprep.subr.bf16.mxu0 0
    %139 = vmatpush1.bf16.msra.mxu0 0
    %140 = vmatprep.subr.bf16.mxu0 0
    %141 = vmatpush1.bf16.msra.mxu0 0
    %142 = vmatprep.subr.bf16.mxu0 0
    %143 = vmatpush1.bf16.msra.mxu0 0
    %144 = vmatprep.subr.bf16.mxu0 0
    %145 = vmatpush1.bf16.msra.mxu0 0
    %146 = vmatprep.subr.bf16.mxu0 0
    %147 = vmatpush1.bf16.msra.mxu0 0
    %148 = vmatprep.mubr.bf16.mxu0 0
    %149 = vmatmul.mubr.bf16.gmra.mrb[0].mxu0 %v93
    %v150 = vpop.f32.mrb[0].mxu0
    %v151 = vadd.f32 0.0, %v150
    %v152 = vpop.f32.mrb[0].mxu0
    %v153 = vpop.f32.mrb[0].mxu0
    %v154 = vadd.f32 0.0, %v153
    %v155 = vpop.f32.mrb[0].mxu0
    %156 = vmatprep.mubr.bf16.mxu0 0
    %157 = vmatmul.mubr.bf16.gmra.mrb[0].mxu0 %v96
    %v158 = vpop.f32.mrb[0].mxu0
    %v159 = vadd.f32 0.0, %v158
    %v160 = vpop.f32.mrb[0].mxu0
    %v161 = vpop.f32.mrb[0].mxu0
    %v162 = vadd.f32 0.0, %v161
    %v163 = vpop.f32.mrb[0].mxu0
    %164 = vmatprep.mubr.bf16.mxu0 0
    %165 = vmatmul.mubr.bf16.gmra.mrb[0].mxu0 %v99
    %v166 = vpop.f32.mrb[0].mxu0
    %v167 = vadd.f32 0.0, %v166
    %v168 = vpop.f32.mrb[0].mxu0
    %v169 = vpop.f32.mrb[0].mxu0
    %v170 = vadd.f32 0.0, %v169
    %v171 = vpop.f32.mrb[0].mxu0
    %172 = vmatprep.mubr.bf16.mxu0 0
    %173 = vmatmul.mubr.bf16.gmra.mrb[0].mxu0 %v102
    %v174 = vpop.f32.mrb[0].mxu0
    %v175 = vadd.f32 0.0, %v174
    %v176 = vpop.f32.mrb[0].mxu0
    %v177 = vpop.f32.mrb[0].mxu0
    %v178 = vadd.f32 0.0, %v177
    %v179 = vpop.f32.mrb[0].mxu0
    %180 = vmatprep.mubr.bf16.mxu0 0
    %181 = vmatmul.mubr.bf16.gmra.mrb[0].mxu0 %v105
    %v182 = vpop.f32.mrb[0].mxu0
    %v183 = vadd.f32 0.0, %v182
    %v184 = vpop.f32.mrb[0].mxu0
    %v185 = vpop.f32.mrb[0].mxu0
    %v186 = vadd.f32 0.0, %v185
    %v187 = vpop.f32.mrb[0].mxu0
    %188 = vmatprep.mubr.bf16.mxu0 0
    %189 = vmatmul.mubr.bf16.gmra.mrb[0].mxu0 %v108
    %v190 = vpop.f32.mrb[0].mxu0
    %v191 = vadd.f32 0.0, %v190
    %v192 = vpop.f32.mrb[0].mxu0
    %v193 = vpop.f32.mrb[0].mxu0
    %v194 = vadd.f32 0.0, %v193
    %v195 = vpop.f32.mrb[0].mxu0
    %196 = vmatprep.mubr.bf16.mxu0 0
    %197 = vmatmul.mubr.bf16.gmra.mrb[0].mxu0 %v111
    %v198 = vpop.f32.mrb[0].mxu0
    %v199 = vadd.f32 0.0, %v198
    %v200 = vpop.f32.mrb[0].mxu0
    %v201 = vpop.f32.mrb[0].mxu0
    %v202 = vadd.f32 0.0, %v201
    %v203 = vpop.f32.mrb[0].mxu0
    %204 = vmatprep.mubr.bf16.mxu0 0
    %205 = vmatmul.mubr.bf16.gmra.mrb[0].mxu0 %v114
    %v206 = vpop.f32.mrb[0].mxu0
    %v207 = vadd.f32 0.0, %v206
    %v208 = vpop.f32.mrb[0].mxu0
    %v209 = vpop.f32.mrb[0].mxu0
    %v210 = vadd.f32 0.0, %v209
    %v211 = vpop.f32.mrb[0].mxu0
    %212 = vdwg.mxu0
    %v213 = vld [vmem:[%s2] sm:$0x1]
    %v215 = vlaneseq
    %v216 = vshrl.u32 %v215, 7
    %v217 = vsub.s32 0, %v216
    %v218 = vrot.slane %v213, %v217
    %v220 = vmul.f32 %v151, %v218
    %v221 = vmul.f32 %v154, %v218
    %v222 = vmul.f32 %v159, %v218
    %v223 = vmul.f32 %v162, %v218
    %v224 = vmul.f32 %v167, %v218
    %v225 = vmul.f32 %v170, %v218
    %v226 = vmul.f32 %v175, %v218
    %v227 = vmul.f32 %v178, %v218
    %v228 = vmul.f32 %v183, %v218
    %v229 = vmul.f32 %v186, %v218
    %v230 = vmul.f32 %v191, %v218
    %v231 = vmul.f32 %v194, %v218
    %v232 = vmul.f32 %v199, %v218
    %v233 = vmul.f32 %v202, %v218
    %v234 = vmul.f32 %v207, %v218
    %v235 = vmul.f32 %v210, %v218
    %v236 = vld [vmem:[%s3] sm:$0x1]
    %v238 = vlaneseq
    %v239 = vshrl.u32 %v238, 7
    %v240 = vsub.s32 0, %v239
    %v241 = vrot.slane %v236, %v240
    %v243 = vadd.f32 %v220, %v241
    %v244 = vadd.f32 %v221, %v241
    %v245 = vadd.f32 %v222, %v241
    %v246 = vadd.f32 %v223, %v241
    %v247 = vadd.f32 %v224, %v241
    %v248 = vadd.f32 %v225, %v241
    %v249 = vadd.f32 %v226, %v241
    %v250 = vadd.f32 %v227, %v241
    %v251 = vadd.f32 %v228, %v241
    %v252 = vadd.f32 %v229, %v241
    %v253 = vadd.f32 %v230, %v241
    %v254 = vadd.f32 %v231, %v241
    %v255 = vadd.f32 %v232, %v241
    %v256 = vadd.f32 %v233, %v241
    %v257 = vadd.f32 %v234, %v241
    %v258 = vadd.f32 %v235, %v241
    %v259 = vtanh.pop %v243
    %v260 = vtanh.pop %v244
    %v261 = vtanh.pop %v245
    %v262 = vtanh.pop %v246
    %v263 = vtanh.pop %v247
    %v264 = vtanh.pop %v248
    %v265 = vtanh.pop %v249
    %v266 = vtanh.pop %v250
    %v267 = vtanh.pop %v251
    %v268 = vtanh.pop %v252
    %v269 = vtanh.pop %v253
    %v270 = vtanh.pop %v254
    %v271 = vtanh.pop %v255
    %v272 = vtanh.pop %v256
    %v273 = vtanh.pop %v257
    %v274 = vtanh.pop %v258
    %v275 = vpack.c.bf16 %v260, %v259
    %v276 = vpack.c.bf16 %v262, %v261
    %v277 = vpack.c.bf16 %v264, %v263
    %v278 = vpack.c.bf16 %v266, %v265
    %v279 = vpack.c.bf16 %v268, %v267
    %v280 = vpack.c.bf16 %v270, %v269
    %v281 = vpack.c.bf16 %v272, %v271
    %v282 = vpack.c.bf16 %v274, %v273
    %v291 = vunpack.c.l.b16 %v275
    %v292 = vunpack.c.h.b16 %v275
    %v293 = vunpack.c.l.b16 %v276
    %v294 = vunpack.c.h.b16 %v276
    %v295 = vunpack.c.l.b16 %v277
    %v296 = vunpack.c.h.b16 %v277
    %v297 = vunpack.c.l.b16 %v278
    %v298 = vunpack.c.h.b16 %v278
    %v299 = vunpack.c.l.b16 %v279
    %v300 = vunpack.c.h.b16 %v279
    %v301 = vunpack.c.l.b16 %v280
    %v302 = vunpack.c.h.b16 %v280
    %v303 = vunpack.c.l.b16 %v281
    %v304 = vunpack.c.h.b16 %v281
    %v305 = vunpack.c.l.b16 %v282
    %v306 = vunpack.c.h.b16 %v282
    %v307 = vpack.c.b16 %v291, %v291
    %v308 = vpack.c.b16 %v292, %v292
    %v309 = vpack.c.b16 %v293, %v293
    %v310 = vpack.c.b16 %v294, %v294
    %v311 = vpack.c.b16 %v295, %v295
    %v312 = vpack.c.b16 %v296, %v296
    %v313 = vpack.c.b16 %v297, %v297
    %v314 = vpack.c.b16 %v298, %v298
    %v315 = vpack.c.b16 %v299, %v299
    %v316 = vpack.c.b16 %v300, %v300
    %v317 = vpack.c.b16 %v301, %v301
    %v318 = vpack.c.b16 %v302, %v302
    %v319 = vpack.c.b16 %v303, %v303
    %v320 = vpack.c.b16 %v304, %v304
    %v321 = vpack.c.b16 %v305, %v305
    %v322 = vpack.c.b16 %v306, %v306
    %vm339 = vcmask 257024
    %340 = vst.msk [vmem:[#allocation2] sm:$0xf] %vm339, %v307
    %341 = vst.msk [vmem:[#allocation2 + $0x4] sm:$0xf] %vm339, %v308
    %342 = vst.msk [vmem:[#allocation2 + $0x8] sm:$0xf] %vm339, %v309
    %343 = vst.msk [vmem:[#allocation2 + $0xc] sm:$0xf] %vm339, %v310
    %344 = vst.msk [vmem:[#allocation2 + $0x10] sm:$0xf] %vm339, %v311
    %345 = vst.msk [vmem:[#allocation2 + $0x14] sm:$0xf] %vm339, %v312
    %346 = vst.msk [vmem:[#allocation2 + $0x18] sm:$0xf] %vm339, %v313
    %347 = vst.msk [vmem:[#allocation2 + $0x1c] sm:$0xf] %vm339, %v314
    %348 = vst.msk [vmem:[#allocation2 + $0x20] sm:$0xf] %vm339, %v315
    %349 = vst.msk [vmem:[#allocation2 + $0x24] sm:$0xf] %vm339, %v316
    %350 = vst.msk [vmem:[#allocation2 + $0x28] sm:$0xf] %vm339, %v317
    %351 = vst.msk [vmem:[#allocation2 + $0x2c] sm:$0xf] %vm339, %v318
    %352 = vst.msk [vmem:[#allocation2 + $0x30] sm:$0xf] %vm339, %v319
    %353 = vst.msk [vmem:[#allocation2 + $0x34] sm:$0xf] %vm339, %v320
    %354 = vst.msk [vmem:[#allocation2 + $0x38] sm:$0xf] %vm339, %v321
    %355 = vst.msk [vmem:[#allocation2 + $0x3c] sm:$0xf] %vm339, %v322
    // Predicated region
    $region18: #{stem_forward.3} parent=1 // pred_check
      _
    $region19: #{stem_forward.3} parent=1 // pred_check_branch
      %357 = sbr.rel (0) target = $region21
    $region20: #{stem_forward.3} parent=1 // pred_region
      %s359 = ssub.s32 1024, 1024
      %360 = vsyncadd [#allocation3], %s359
      %s361 = sshll.u32 [#allocation2], 4
      %s362 = int_to_ptr.vmem [resolvable:$true] %s361
      %367 = dma.vmem_to_hbm [thread:$0]  %s362, 1024, %s4, [#allocation3], 64, 64, 4
    $region21: #{stem_forward.3} parent=1 // pred_fallthru
      _
    // Predicated region
    $region22: #{stem_forward.3} parent=1 // pred_check
      _
    $region23: #{stem_forward.3} parent=1 // pred_check_branch
      %369 = sbr.rel (0) target = $region25
    $region24: #{stem_forward.3} parent=1 // pred_region
      %370 = dma.done [#allocation3], 1024
    $region25: #{stem_forward.3} parent=1 // pred_fallthru
      _
    %371 = vsyncpa [#allocation3], 1

</llo_original>
